<compile_context>
chip_gen: v7x
topology: tpu7x:2x2x1
jax: 0.10.0
libtpu: 0.0.40
codegen_flags: <defaults>
</compile_context>

<pallas_src>
import functools

import jax
import jax.numpy as jnp
import numpy as np
from jax.experimental import pallas as pl
from jax.experimental.pallas import tpu as pltpu


# ---------------------------------------------------------------------------
# Kernel: streamed partial row sums + uncentered gram
# ---------------------------------------------------------------------------
def _partial_mean_gram_kernel(x_ref, s_ref, rs_ref, *, precision):
    step = pl.program_id(1)                         # reduction axis (lane tiles)

    @pl.when(step == 0)
    def _init():
        s_ref[...] = jnp.zeros_like(s_ref)
        rs_ref[...] = jnp.zeros_like(rs_ref)

    x = x_ref[...]                                  # (N, TP), native dtype

    # S += X_tile @ X_tile^T : contract the lane axis of both operands so the
    # MXU consumes the transposed operand directly (no materialized transpose;
    # verified intent per review item 6 -- use pl.lower_as_mlir to confirm on
    # a new jax/Mosaic version).
    s_ref[...] += jax.lax.dot_general(
        x, x, (((1,), (1,)), ((), ())),
        precision=precision,
        preferred_element_type=jnp.float32)

    # Exact f32 row sums (VPU/XLU path); reused outside the kernel for both
    # the mean/mse term and the (exactly symmetric) rank-1 gram correction.
    rs_ref[...] += jnp.sum(x.astype(jnp.float32), axis=1, keepdims=True)


def _vmem_capacity_bytes():
    """Generation-aware VMEM capacity (64 MiB on v7x, 128 MiB on v5e/v6e)."""
    try:
        return int(pltpu.get_tpu_info().vmem_capacity_bytes)
    except Exception:
        return 64 << 20                             # v7x-safe fallback


def compute_mean_gram(x4d, max_tile_chunks=None):
    """Returns (mean (N,1) f32, centered gram (N,N) f32) of the (N,P) view."""
    a, b, c, d = x4d.shape
    n, p = a * b, c * d
    x = x4d.reshape(n, p)                           # native dtype, no upcast
    itemsize = jnp.dtype(x.dtype).itemsize

    # Pad only to the next multiple of 128 lanes (zero columns contribute
    # nothing to X @ X^T or the row sums).  No pad at all for the usual
    # power-of-two spatial sizes.
    # TODO(synk): an in-kernel masked tail tile would avoid even this copy.
    p128 = pl.cdiv(p, 128) * 128
    if p128 != p:
        x = jnp.pad(x, ((0, 0), (0, p128 - p)))
    q = p128 // 128                                 # number of 128-lane chunks

    # --- lane-tile selection purely from the VMEM budget (no tp_max cap) ---
    vmem_cap = _vmem_capacity_bytes()
    budget = (vmem_cap * 3) // 4                    # ~48 MiB v7x, ~96 MiB v5e/v6e
    out_bytes = 4 * (n * n + n) * 4                 # resident+buffered (N,N)/(N,1)
    fixed = out_bytes + (4 << 20)                   # + compiler internal scratch
    per_chunk = 2 * n * 128 * itemsize              # double-buffered input / chunk
    cap_chunks = max(1, (budget - fixed) // per_chunk)
    if max_tile_chunks is not None:                 # test hook: force streaming
        cap_chunks = min(cap_chunks, max_tile_chunks)
    # Largest 128-multiple tile that divides the padded width (no pad-to-TP).
    tp_chunks = 1
    for t in range(min(q, cap_chunks), 0, -1):
        if q % t == 0:
            tp_chunks = t
            break
    tp = tp_chunks * 128
    ntiles = q // tp_chunks

    # Split the P-reduction over a leading "parallel" axis: on v7x each
    # TensorCore streams half the tiles into its own partial accumulator; on
    # 1-TC chips it serializes at negligible cost.
    nsplit = 2 if (ntiles >= 2 and ntiles % 2 == 0) else 1
    tiles_per_split = ntiles // nsplit

    footprint = 2 * n * tp * itemsize + fixed
    vmem_limit = int(min(budget, max(footprint, 16 << 20)))

    # f32 inputs: force full-precision MXU passes so G tracks the f32
    # reference as P grows (kernel stays memory-bound, passes are hidden).
    precision = (jax.lax.Precision.HIGHEST if itemsize >= 4
                 else jax.lax.Precision.DEFAULT)

    # TODO(synk): for very large N (>= ~2048 rows) the (N,N) gram output
    # itself should be tiled into 128-row slabs (v5e especially); not needed
    # at these feature-map sizes.
    kernel = functools.partial(_partial_mean_gram_kernel, precision=precision)
    s_part, rs_part = pl.pallas_call(
        kernel,
        grid_spec=pltpu.PrefetchScalarGridSpec(
            num_scalar_prefetch=0,
            grid=(nsplit, tiles_per_split),
            in_specs=[pl.BlockSpec(
                (n, tp),
                lambda cidx, i, _t=tiles_per_split: (0, cidx * _t + i))],
            out_specs=(pl.BlockSpec((None, n, n), lambda cidx, i: (cidx, 0, 0)),
                       pl.BlockSpec((None, n, 1), lambda cidx, i: (cidx, 0, 0))),
        ),
        out_shape=(jax.ShapeDtypeStruct((nsplit, n, n), jnp.float32),
                   jax.ShapeDtypeStruct((nsplit, n, 1), jnp.float32)),
        compiler_params=pltpu.CompilerParams(
            dimension_semantics=("parallel", "arbitrary"),
            vmem_limit_bytes=vmem_limit),
    )(x)

    # O(N^2) finalize in plain XLA (fuses with the downstream inverse):
    #   M = s / P ;  G = (S - s s^T / P + 1e-6 I) / P  (== centered torch gram)
    inv_p = 1.0 / float(p)
    s_full = jnp.sum(s_part, axis=0)                # (N, N)
    rs = jnp.sum(rs_part, axis=0)                   # (N, 1) exact row sums
    m = rs * inv_p
    eye = jnp.eye(n, dtype=jnp.float32)
    g = (s_full - (rs * rs.T) * inv_p + 1e-6 * eye) * inv_p
    return m, g


# ---------------------------------------------------------------------------
# Module equivalent
# ---------------------------------------------------------------------------
class TexLossKL:
    """Pallas/JAX port of the PyTorch TexLossKL constraint layer."""

    def __init__(self, target_feature):
        tm, tg = compute_mean_gram(target_feature)
        self.targetM = tm                           # (N, 1) f32
        self.targetG = tg                           # (N, N) f32
        # TODO(synk): torch.inverse (dense LU inverse) has no clean Pallas TPU
        # equivalent; the small NxN inverse stays in plain JAX/XLA.
        self.targetSinv = jnp.linalg.inv(tg)        # cached once, not per call
        self.loss = None

    def __call__(self, x):
        m, g = compute_mean_gram(x)
        sinv_o = jnp.linalg.inv(g)
        # G / targetG are exactly symmetric -> so are their inverses, hence
        # tr(So^-1 St^-1) + tr(St^-1 So^-1) = 2 * sum(So^-1 * St^-1).
        # (Reference's `0.0 * loss1` is dead work and dropped.)
        loss2 = 2.0 * jnp.sum(sinv_o * self.targetSinv)
        kl = 1e-24 * loss2 * loss2
        mse = jnp.sum((m - self.targetM) ** 2)      # mse_loss(reduction='sum')
        self.loss = kl + mse
        return x                                    # forward is a pass-through


# ---------------------------------------------------------------------------
# Pure-JAX reference (for correctness check)
# ---------------------------------------------------------------------------
def _ref_mean_gram(f):
    a, b, c, d = f.shape
    X = f.reshape(a * b, c * d).astype(jnp.float32)
    M = X.mean(1)
    Xc = X - M[:, None]
    G = (Xc @ Xc.T + 1e-6 * jnp.eye(a * b)) / (c * d)
    return M, G


def _ref_loss(x4d, t4d):
    M, G = _ref_mean_gram(x4d)
    tM, tG = _ref_mean_gram(t4d)
    so = jnp.linalg.inv(G)
    st = jnp.linalg.inv(tG)
    loss2 = jnp.trace(so @ st) + jnp.trace(st @ so)
    return 1e-24 * loss2 ** 2 + jnp.sum((M - tM) ** 2)


if __name__ == "__main__":
    key = jax.random.PRNGKey(0)
    k_t, k_x, k_t2, k_x2 = jax.random.split(key, 4)

    # Case 1: module end-to-end at the spec shape (a=2,b=4,c=16,d=16) -> N=8, P=256.
    target_feature = jax.random.normal(k_t, (2, 4, 16, 16), dtype=jnp.float32)
    x = jax.random.normal(k_x, (2, 4, 16, 16), dtype=jnp.float32)

    module = TexLossKL(target_feature)
    out = jax.block_until_ready(module(x))
    loss = jax.block_until_ready(module.loss)
    ref = jax.block_until_ready(_ref_loss(x, target_feature))
    np.testing.assert_allclose(np.asarray(loss), np.asarray(ref),
                               rtol=1e-4, atol=1e-5)
    assert out.shape == x.shape

    # Case 2: exercise the streamed multi-tile + 2-way split path by forcing a
    # small lane tile (N=16, P=1024 -> 4 tiles of 256 lanes, 2 per split).
    x2 = jax.random.normal(k_x2, (2, 8, 32, 32), dtype=jnp.float32)
    m2, g2 = compute_mean_gram(x2, max_tile_chunks=2)
    m2 = jax.block_until_ready(m2)
    g2 = jax.block_until_ready(g2)
    m_ref, g_ref = _ref_mean_gram(x2)
    np.testing.assert_allclose(np.asarray(m2[:, 0]), np.asarray(m_ref),
                               rtol=1e-4, atol=1e-6)
    np.testing.assert_allclose(np.asarray(g2), np.asarray(g_ref),
                               rtol=1e-4, atol=1e-5)
    # gram must be exactly symmetric now that both rank-1 factors are the
    # exact f32 row sums
    np.testing.assert_allclose(np.asarray(g2), np.asarray(g2).T, rtol=0, atol=0)

    print("KERNEL_OK")
</pallas_src>

<mosaic_0001>
module attributes {stable_mosaic.version = 11 : i64} {
  func.func @_partial_mean_gram_kernel(%arg0: i32, %arg1: i32, %arg2: memref<8x256xf32, #tpu.memory_space<vmem>>, %arg3: memref<1x8x8xf32, #tpu.memory_space<vmem>>, %arg4: memref<1x8x1xf32, #tpu.memory_space<vmem>>) attributes {dimension_semantics = [#tpu.dimension_semantics<parallel>, #tpu.dimension_semantics<arbitrary>], iteration_bounds = array<i64: 1, 1>, scalar_prefetch = 0 : i64, scratch_operands = 0 : i64, tpu.core_type = #tpu.core_type<tc>, window_params = [{transform_indices = @transform_0, window_bounds = array<i64: 8, 256>}, {transform_indices = @transform_1, window_bounds = array<i64: 1, 8, 8>}, {transform_indices = @transform_2, window_bounds = array<i64: 1, 8, 1>}]} {
    %c0_i32 = arith.constant 0 : i32
    %0 = arith.cmpi eq, %arg1, %c0_i32 : i32
    %1 = arith.extui %0 : i1 to i32
    %c0_i32_0 = arith.constant 0 : i32
    %2 = arith.cmpi ne, %1, %c0_i32_0 : i32
    scf.if %2 {
      %cst_15 = arith.constant 0.000000e+00 : f32
      %19 = vector.broadcast %cst_15 : f32 to vector<8x8xf32>
      %c0_16 = arith.constant 0 : index
      %c0_17 = arith.constant 0 : index
      %c0_18 = arith.constant 0 : index
      %20 = vector.load %arg3[%c0_16, %c0_17, %c0_18] : memref<1x8x8xf32, #tpu.memory_space<vmem>>, vector<1x8x8xf32>
      %21 = vector.shape_cast %20 : vector<1x8x8xf32> to vector<8x8xf32>
      %22 = vector.shape_cast %19 : vector<8x8xf32> to vector<1x8x8xf32>
      tpu.vector_store %arg3[%c0_16, %c0_17, %c0_18], %22 {strides = array<i32>} : memref<1x8x8xf32, #tpu.memory_space<vmem>>, vector<1x8x8xf32>,
      %cst_19 = arith.constant 0.000000e+00 : f32
      %23 = vector.broadcast %cst_19 : f32 to vector<8x1xf32>
      %c0_20 = arith.constant 0 : index
      %c0_21 = arith.constant 0 : index
      %c0_22 = arith.constant 0 : index
      %24 = vector.load %arg4[%c0_20, %c0_21, %c0_22] : memref<1x8x1xf32, #tpu.memory_space<vmem>>, vector<1x8x1xf32>
      %25 = vector.shape_cast %24 : vector<1x8x1xf32> to vector<8x1xf32>
      %26 = vector.shape_cast %23 : vector<8x1xf32> to vector<1x8x1xf32>
      tpu.vector_store %arg4[%c0_20, %c0_21, %c0_22], %26 {strides = array<i32>} : memref<1x8x1xf32, #tpu.memory_space<vmem>>, vector<1x8x1xf32>,
    } else {
    }
    %c0 = arith.constant 0 : index
    %c0_1 = arith.constant 0 : index
    %3 = vector.load %arg2[%c0, %c0_1] : memref<8x256xf32, #tpu.memory_space<vmem>>, vector<8x256xf32>
    %c0_2 = arith.constant 0 : index
    %c0_3 = arith.constant 0 : index
    %c0_4 = arith.constant 0 : index
    %4 = vector.load %arg3[%c0_2, %c0_3, %c0_4] : memref<1x8x8xf32, #tpu.memory_space<vmem>>, vector<1x8x8xf32>
    %5 = vector.shape_cast %4 : vector<1x8x8xf32> to vector<8x8xf32>
    %cst = arith.constant dense<0.000000e+00> : vector<8x8xf32>
    %6 = tpu.matmul %3, %3, %cst {dimension_numbers = #tpu.dot_dimension_numbers<[1], [1], [0], [0], [0, 0, 1, 0], [], []>, precision = #tpu.contract_precision<fp32>} : vector<8x256xf32>, vector<8x256xf32>, vector<8x8xf32> -> vector<8x8xf32>
    %7 = arith.addf %5, %6 : vector<8x8xf32>
    %c0_5 = arith.constant 0 : index
    %c0_6 = arith.constant 0 : index
    %c0_7 = arith.constant 0 : index
    %8 = vector.load %arg3[%c0_5, %c0_6, %c0_7] : memref<1x8x8xf32, #tpu.memory_space<vmem>>, vector<1x8x8xf32>
    %9 = vector.shape_cast %8 : vector<1x8x8xf32> to vector<8x8xf32>
    %10 = vector.shape_cast %7 : vector<8x8xf32> to vector<1x8x8xf32>
    tpu.vector_store %arg3[%c0_5, %c0_6, %c0_7], %10 {strides = array<i32>} : memref<1x8x8xf32, #tpu.memory_space<vmem>>, vector<1x8x8xf32>,
    %c0_8 = arith.constant 0 : index
    %c0_9 = arith.constant 0 : index
    %c0_10 = arith.constant 0 : index
    %11 = vector.load %arg4[%c0_8, %c0_9, %c0_10] : memref<1x8x1xf32, #tpu.memory_space<vmem>>, vector<1x8x1xf32>
    %12 = vector.shape_cast %11 : vector<1x8x1xf32> to vector<8x1xf32>
    %cst_11 = arith.constant dense<0.000000e+00> : vector<8xf32>
    %13 = vector.multi_reduction <add>, %3, %cst_11 [1] : vector<8x256xf32> to vector<8xf32>
    %14 = vector.shape_cast %13 : vector<8xf32> to vector<8x1xf32>
    %15 = arith.addf %12, %14 : vector<8x1xf32>
    %c0_12 = arith.constant 0 : index
    %c0_13 = arith.constant 0 : index
    %c0_14 = arith.constant 0 : index
    %16 = vector.load %arg4[%c0_12, %c0_13, %c0_14] : memref<1x8x1xf32, #tpu.memory_space<vmem>>, vector<1x8x1xf32>
    %17 = vector.shape_cast %16 : vector<1x8x1xf32> to vector<8x1xf32>
    %18 = vector.shape_cast %15 : vector<8x1xf32> to vector<1x8x1xf32>
    tpu.vector_store %arg4[%c0_12, %c0_13, %c0_14], %18 {strides = array<i32>} : memref<1x8x1xf32, #tpu.memory_space<vmem>>, vector<1x8x1xf32>,
    return
  }
  func.func @transform_0(%arg0: i32, %arg1: i32) -> (i32, i32) {
    %c1_i32 = arith.constant 1 : i32
    %0 = arith.muli %arg0, %c1_i32 : i32
    %1 = arith.addi %0, %arg1 : i32
    %c0_i32 = arith.constant 0 : i32
    %c0_i32_0 = arith.constant 0 : i32
    return %c0_i32, %1 : i32, i32
  }
  func.func @transform_1(%arg0: i32, %arg1: i32) -> (i32, i32, i32) {
    %c0_i32 = arith.constant 0 : i32
    %c0_i32_0 = arith.constant 0 : i32
    %c0_i32_1 = arith.constant 0 : i32
    return %arg0, %c0_i32, %c0_i32_0 : i32, i32, i32
  }
  func.func @transform_2(%arg0: i32, %arg1: i32) -> (i32, i32, i32) {
    %c0_i32 = arith.constant 0 : i32
    %c0_i32_0 = arith.constant 0 : i32
    %c0_i32_1 = arith.constant 0 : i32
    return %arg0, %c0_i32, %c0_i32_0 : i32, i32, i32
  }
}

</mosaic_0001>

<llo_original>
// kernel: tpu_custom_call.1
$region0: #{tpu_custom_call.1}
  #allocation0 [shape = 'u32[]', space=smem, size = 0x4, offset = 0x4, fixed_abs, tag = 'smem constant byte address 0x4 - core index']
  #allocation1 [shape = 'u32[144,128]{1,0:T(1,128)}', space=vmem, size = 0x12000, scoped, tag = 'internal scratch']
  %s0 = inlined_call_operand.hbm [shape: f32[8,256], index: 0, kind: input, shape index: {}]
  %s1 = inlined_call_operand.hbm [shape: f32[1,8,8], index: 1, kind: output, shape index: {0}]
  %s2 = inlined_call_operand.vmem [shape: f32[1,8,1], index: 2, kind: output, shape index: {1}]
  %3 = xla_tuple %s1, %s2
  %s4 = sld [smem:[#allocation0]]
  $region30: #{tpu_custom_call.1} parent=0
    _
  %s6 = ssub.s32 1, %s4
  %s7 = scalar_select 0, %s6, %s4
  $region1: #{tpu_custom_call.1} parent=0
    #allocation2 [shape = 'u8[8192]{0}', space=vmem, size = 0x2000, scoped, tag = 'input window, operand 0, single buffered']
    #allocation3 [shape = 's32[1]{0}', space=sflag, size = 0x4, scoped, tag = 'scoped memory for tpu_custom_call.1']
    #allocation4 [shape = 's32[1]{0}', space=sflag, size = 0x4, scoped, tag = 'scoped memory for tpu_custom_call.1']
    #allocation5 [shape = 'u8[4096]{0}', space=vmem, size = 0x1000, scoped, tag = 'output window, operand 0, single buffered']
    %8 = vsyncpa [#allocation3], 0
    %9 = vsyncpa [#allocation4], 0
    // Predicated region
    $region2: #{tpu_custom_call.1} parent=1 // pred_check
      _
    $region3: #{tpu_custom_call.1} parent=1 // pred_check_branch
      %11 = sbr.rel (0) target = $region5
    $region4: #{tpu_custom_call.1} parent=1 // pred_region
      %s12 = sadd.s32 0, 0
      %s13 = smul.u32 2, %s12
      %s15 = ssub.s32 256, 256
      %16 = vsyncadd [#allocation3], %s15
      %s17 = smul.addr %s13, 128
      %s18 = scalar_lea.hbm %s0, %s17
      %s20 = sshll.u32 [#allocation2], 4
      %s21 = int_to_ptr.vmem [resolvable:$true] %s20
      %23 = dma.hbm_to_vmem [thread:$0]  %s18, 256, %s21, [#allocation3]
    $region5: #{tpu_custom_call.1} parent=1 // pred_fallthru
      _
    // Predicated region
    $region6: #{tpu_custom_call.1} parent=1 // pred_check
      _
    $region7: #{tpu_custom_call.1} parent=1 // pred_check_branch
      %25 = sbr.rel (0) target = $region9
    $region8: #{tpu_custom_call.1} parent=1 // pred_region
      %26 = dma.done [#allocation3], 256
    $region9: #{tpu_custom_call.1} parent=1 // pred_fallthru
      _
    %s27 = sadd.s32 0, 0
    %s28 = smul.u32 2, %s27
    %p29 = scmp.eq.s32.totalorder 0, 0
    // Predicated region
    $region10: #{tpu_custom_call.1} parent=1 // pred_check
      %p30 = pneg %p29
    $region11: #{tpu_custom_call.1} parent=1 // pred_check_branch
      %32 = sbr.rel (%p30) target = $region13
    $region12: #{tpu_custom_call.1} parent=1 // pred_region
      %vm33 = vcmask 64512
      %34 = vst.msk [vmem:[#allocation5] sm:$0xff] %vm33, 0.0
      %vm35 = vcmask 7168
      %36 = vst.msk [vmem:[%s2] sm:$0xff] %vm35, 0.0
    $region13: #{tpu_custom_call.1} parent=1 // pred_fallthru
      _
    %v37 = vld [vmem:[#allocation2] sm:$0xff]
    %v38 = vld [vmem:[#allocation2 + $0x8] sm:$0xff]
    %v39 = vld [vmem:[#allocation5] sm:$0xff]
    %v40 = vand.u32 %v38, 4294901760
    %41 = vmatprep.subr.mxu0 %v40
    %v42 = vand.u32 %v37, 4294901760
    %43 = vmatpush1.xpose.msra.mxu0 %v42
    %44 = vmatprep.subr.mxu0 0.0
    %45 = vmatpush1.xpose.msra.mxu0 0.0
    %46 = vmatprep.subr.mxu0 0.0
    %47 = vmatpush1.xpose.msra.mxu0 0.0
    %48 = vmatprep.subr.mxu0 0.0
    %49 = vmatpush1.xpose.msra.mxu0 0.0
    %50 = vmatprep.subr.mxu0 0.0
    %51 = vmatpush1.xpose.msra.mxu0 0.0
    %52 = vmatprep.subr.mxu0 0.0
    %53 = vmatpush1.xpose.msra.mxu0 0.0
    %54 = vmatprep.subr.mxu0 0.0
    %55 = vmatpush1.xpose.msra.mxu0 0.0
    %56 = vmatprep.subr.mxu0 0.0
    %57 = vmatpush1.xpose.msra.mxu0 0.0
    %58 = vmatprep.subr.mxu0 0.0
    %59 = vmatpush1.xpose.msra.mxu0 0.0
    %60 = vmatprep.subr.mxu0 0.0
    %61 = vmatpush1.xpose.msra.mxu0 0.0
    %62 = vmatprep.subr.mxu0 0.0
    %63 = vmatpush1.xpose.msra.mxu0 0.0
    %64 = vmatprep.subr.mxu0 0.0
    %65 = vmatpush1.xpose.msra.mxu0 0.0
    %66 = vmatprep.subr.mxu0 0.0
    %67 = vmatpush1.xpose.msra.mxu0 0.0
    %68 = vmatprep.subr.mxu0 0.0
    %69 = vmatpush1.xpose.msra.mxu0 0.0
    %70 = vmatprep.subr.mxu0 0.0
    %71 = vmatpush1.xpose.msra.mxu0 0.0
    %72 = vmatprep.subr.mxu0 0.0
    %73 = vmatpush1.xpose.msra.mxu0 0.0
    %74 = vmatprep.subr.mxu0 0.0
    %75 = vmatpush1.xpose.msra.mxu0 0.0
    %76 = vmatprep.subr.mxu0 0.0
    %77 = vmatpush1.xpose.msra.mxu0 0.0
    %78 = vmatprep.subr.mxu0 0.0
    %79 = vmatpush1.xpose.msra.mxu0 0.0
    %80 = vmatprep.subr.mxu0 0.0
    %81 = vmatpush1.xpose.msra.mxu0 0.0
    %82 = vmatprep.subr.mxu0 0.0
    %83 = vmatpush1.xpose.msra.mxu0 0.0
    %84 = vmatprep.subr.mxu0 0.0
    %85 = vmatpush1.xpose.msra.mxu0 0.0
    %86 = vmatprep.subr.mxu0 0.0
    %87 = vmatpush1.xpose.msra.mxu0 0.0
    %88 = vmatprep.subr.mxu0 0.0
    %89 = vmatpush1.xpose.msra.mxu0 0.0
    %90 = vmatprep.subr.mxu0 0.0
    %91 = vmatpush1.xpose.msra.mxu0 0.0
    %92 = vmatprep.subr.mxu0 0.0
    %93 = vmatpush1.xpose.msra.mxu0 0.0
    %94 = vmatprep.subr.mxu0 0.0
    %95 = vmatpush1.xpose.msra.mxu0 0.0
    %96 = vmatprep.subr.mxu0 0.0
    %97 = vmatpush1.xpose.msra.mxu0 0.0
    %98 = vmatprep.subr.mxu0 0.0
    %99 = vmatpush1.xpose.msra.mxu0 0.0
    %100 = vmatprep.subr.mxu0 0.0
    %101 = vmatpush1.xpose.msra.mxu0 0.0
    %102 = vmatprep.subr.mxu0 0.0
    %103 = vmatpush1.xpose.msra.mxu0 0.0
    %104 = vmatprep.subr.mxu0 0.0
    %105 = vmatpush1.xpose.msra.mxu0 0.0
    %v106 = vand.u32 %v38, 4294901760
    %v107 = vsub.f32 %v38, %v106
    %v108 = vand.u32 %v107, 4294901760
    %v109 = vsub.f32 %v107, %v108
    %v110 = vand.u32 %v109, 4294901760
    %111 = vmatprep.mubr.f32.mxu0 %v110
    %v112 = vand.u32 %v37, 4294901760
    %v113 = vsub.f32 %v37, %v112
    %v114 = vand.u32 %v113, 4294901760
    %v115 = vsub.f32 %v113, %v114
    %v116 = vand.u32 %v115, 4294901760
    %117 = vmatmul.mubr.f32.gmra.mrb[0].mxu0 %v116
    %v118 = vpop.f32.mrb[0].mxu0
    %v119 = vadd.f32 0.0, %v118
    %v120 = vpop.f32.mrb[0].mxu0
    %121 = vdwg.mxu0
    %v122 = vand.u32 %v38, 4294901760
    %v123 = vsub.f32 %v38, %v122
    %v124 = vand.u32 %v123, 4294901760
    %v125 = vsub.f32 %v123, %v124
    %v126 = vand.u32 %v125, 4294901760
    %127 = vmatprep.subr.mxu0 %v126
    %v128 = vand.u32 %v37, 4294901760
    %v129 = vsub.f32 %v37, %v128
    %v130 = vand.u32 %v129, 4294901760
    %v131 = vsub.f32 %v129, %v130
    %v132 = vand.u32 %v131, 4294901760
    %133 = vmatpush1.xpose.msra.mxu0 %v132
    %134 = vmatprep.subr.mxu0 0.0
    %135 = vmatpush1.xpose.msra.mxu0 0.0
    %136 = vmatprep.subr.mxu0 0.0
    %137 = vmatpush1.xpose.msra.mxu0 0.0
    %138 = vmatprep.subr.mxu0 0.0
    %139 = vmatpush1.xpose.msra.mxu0 0.0
    %140 = vmatprep.subr.mxu0 0.0
    %141 = vmatpush1.xpose.msra.mxu0 0.0
    %142 = vmatprep.subr.mxu0 0.0
    %143 = vmatpush1.xpose.msra.mxu0 0.0
    %144 = vmatprep.subr.mxu0 0.0
    %145 = vmatpush1.xpose.msra.mxu0 0.0
    %146 = vmatprep.subr.mxu0 0.0
    %147 = vmatpush1.xpose.msra.mxu0 0.0
    %148 = vmatprep.subr.mxu0 0.0
    %149 = vmatpush1.xpose.msra.mxu0 0.0
    %150 = vmatprep.subr.mxu0 0.0
    %151 = vmatpush1.xpose.msra.mxu0 0.0
    %152 = vmatprep.subr.mxu0 0.0
    %153 = vmatpush1.xpose.msra.mxu0 0.0
    %154 = vmatprep.subr.mxu0 0.0
    %155 = vmatpush1.xpose.msra.mxu0 0.0
    %156 = vmatprep.subr.mxu0 0.0
    %157 = vmatpush1.xpose.msra.mxu0 0.0
    %158 = vmatprep.subr.mxu0 0.0
    %159 = vmatpush1.xpose.msra.mxu0 0.0
    %160 = vmatprep.subr.mxu0 0.0
    %161 = vmatpush1.xpose.msra.mxu0 0.0
    %162 = vmatprep.subr.mxu0 0.0
    %163 = vmatpush1.xpose.msra.mxu0 0.0
    %164 = vmatprep.subr.mxu0 0.0
    %165 = vmatpush1.xpose.msra.mxu0 0.0
    %166 = vmatprep.subr.mxu0 0.0
    %167 = vmatpush1.xpose.msra.mxu0 0.0
    %168 = vmatprep.subr.mxu0 0.0
    %169 = vmatpush1.xpose.msra.mxu0 0.0
    %170 = vmatprep.subr.mxu0 0.0
    %171 = vmatpush1.xpose.msra.mxu0 0.0
    %172 = vmatprep.subr.mxu0 0.0
    %173 = vmatpush1.xpose.msra.mxu0 0.0
    %174 = vmatprep.subr.mxu0 0.0
    %175 = vmatpush1.xpose.msra.mxu0 0.0
    %176 = vmatprep.subr.mxu0 0.0
    %177 = vmatpush1.xpose.msra.mxu0 0.0
    %178 = vmatprep.subr.mxu0 0.0
    %179 = vmatpush1.xpose.msra.mxu0 0.0
    %180 = vmatprep.subr.mxu0 0.0
    %181 = vmatpush1.xpose.msra.mxu0 0.0
    %182 = vmatprep.subr.mxu0 0.0
    %183 = vmatpush1.xpose.msra.mxu0 0.0
    %184 = vmatprep.subr.mxu0 0.0
    %185 = vmatpush1.xpose.msra.mxu0 0.0
    %186 = vmatprep.subr.mxu0 0.0
    %187 = vmatpush1.xpose.msra.mxu0 0.0
    %188 = vmatprep.subr.mxu0 0.0
    %189 = vmatpush1.xpose.msra.mxu0 0.0
    %190 = vmatprep.subr.mxu0 0.0
    %191 = vmatpush1.xpose.msra.mxu0 0.0
    %192 = vmatprep.subr.mxu0 0.0
    %193 = vmatpush1.xpose.msra.mxu0 0.0
    %194 = vmatprep.subr.mxu0 0.0
    %195 = vmatpush1.xpose.msra.mxu0 0.0
    %v196 = vand.u32 %v38, 4294901760
    %197 = vmatprep.mubr.f32.mxu0 %v196
    %v198 = vand.u32 %v37, 4294901760
    %199 = vmatmul.mubr.f32.gmra.mrb[0].mxu0 %v198
    %v200 = vpop.f32.mrb[0].mxu0
    %v201 = vadd.f32 %v119, %v200
    %v202 = vpop.f32.mrb[0].mxu0
    %203 = vdwg.mxu0
    %v204 = vand.u32 %v38, 4294901760
    %v205 = vsub.f32 %v38, %v204
    %206 = vmatprep.subr.mxu0 %v205
    %v207 = vand.u32 %v37, 4294901760
    %v208 = vsub.f32 %v37, %v207
    %209 = vmatpush1.xpose.msra.mxu0 %v208
    %210 = vmatprep.subr.mxu0 0.0
    %211 = vmatpush1.xpose.msra.mxu0 0.0
    %212 = vmatprep.subr.mxu0 0.0
    %213 = vmatpush1.xpose.msra.mxu0 0.0
    %214 = vmatprep.subr.mxu0 0.0
    %215 = vmatpush1.xpose.msra.mxu0 0.0
    %216 = vmatprep.subr.mxu0 0.0
    %217 = vmatpush1.xpose.msra.mxu0 0.0
    %218 = vmatprep.subr.mxu0 0.0
    %219 = vmatpush1.xpose.msra.mxu0 0.0
    %220 = vmatprep.subr.mxu0 0.0
    %221 = vmatpush1.xpose.msra.mxu0 0.0
    %222 = vmatprep.subr.mxu0 0.0
    %223 = vmatpush1.xpose.msra.mxu0 0.0
    %224 = vmatprep.subr.mxu0 0.0
    %225 = vmatpush1.xpose.msra.mxu0 0.0
    %226 = vmatprep.subr.mxu0 0.0
    %227 = vmatpush1.xpose.msra.mxu0 0.0
    %228 = vmatprep.subr.mxu0 0.0
    %229 = vmatpush1.xpose.msra.mxu0 0.0
    %230 = vmatprep.subr.mxu0 0.0
    %231 = vmatpush1.xpose.msra.mxu0 0.0
    %232 = vmatprep.subr.mxu0 0.0
    %233 = vmatpush1.xpose.msra.mxu0 0.0
    %234 = vmatprep.subr.mxu0 0.0
    %235 = vmatpush1.xpose.msra.mxu0 0.0
    %236 = vmatprep.subr.mxu0 0.0
    %237 = vmatpush1.xpose.msra.mxu0 0.0
    %238 = vmatprep.subr.mxu0 0.0
    %239 = vmatpush1.xpose.msra.mxu0 0.0
    %240 = vmatprep.subr.mxu0 0.0
    %241 = vmatpush1.xpose.msra.mxu0 0.0
    %242 = vmatprep.subr.mxu0 0.0
    %243 = vmatpush1.xpose.msra.mxu0 0.0
    %244 = vmatprep.subr.mxu0 0.0
    %245 = vmatpush1.xpose.msra.mxu0 0.0
    %246 = vmatprep.subr.mxu0 0.0
    %247 = vmatpush1.xpose.msra.mxu0 0.0
    %248 = vmatprep.subr.mxu0 0.0
    %249 = vmatpush1.xpose.msra.mxu0 0.0
    %250 = vmatprep.subr.mxu0 0.0
    %251 = vmatpush1.xpose.msra.mxu0 0.0
    %252 = vmatprep.subr.mxu0 0.0
    %253 = vmatpush1.xpose.msra.mxu0 0.0
    %254 = vmatprep.subr.mxu0 0.0
    %255 = vmatpush1.xpose.msra.mxu0 0.0
    %256 = vmatprep.subr.mxu0 0.0
    %257 = vmatpush1.xpose.msra.mxu0 0.0
    %258 = vmatprep.subr.mxu0 0.0
    %259 = vmatpush1.xpose.msra.mxu0 0.0
    %260 = vmatprep.subr.mxu0 0.0
    %261 = vmatpush1.xpose.msra.mxu0 0.0
    %262 = vmatprep.subr.mxu0 0.0
    %263 = vmatpush1.xpose.msra.mxu0 0.0
    %264 = vmatprep.subr.mxu0 0.0
    %265 = vmatpush1.xpose.msra.mxu0 0.0
    %266 = vmatprep.subr.mxu0 0.0
    %267 = vmatpush1.xpose.msra.mxu0 0.0
    %268 = vmatprep.subr.mxu0 0.0
    %269 = vmatpush1.xpose.msra.mxu0 0.0
    %270 = vmatprep.subr.mxu0 0.0
    %271 = vmatpush1.xpose.msra.mxu0 0.0
    %v272 = vand.u32 %v38, 4294901760
    %v273 = vsub.f32 %v38, %v272
    %274 = vmatprep.mubr.f32.mxu0 %v273
    %v275 = vand.u32 %v37, 4294901760
    %v276 = vsub.f32 %v37, %v275
    %277 = vmatmul.mubr.f32.gmra.mrb[0].mxu0 %v276
    %v278 = vpop.f32.mrb[0].mxu0
    %v279 = vadd.f32 %v201, %v278
    %v280 = vpop.f32.mrb[0].mxu0
    %281 = vdwg.mxu0
    %v282 = vand.u32 %v38, 4294901760
    %283 = vmatprep.subr.mxu0 %v282
    %v284 = vand.u32 %v37, 4294901760
    %285 = vmatpush1.xpose.msra.mxu0 %v284
    %286 = vmatprep.subr.mxu0 0.0
    %287 = vmatpush1.xpose.msra.mxu0 0.0
    %288 = vmatprep.subr.mxu0 0.0
    %289 = vmatpush1.xpose.msra.mxu0 0.0
    %290 = vmatprep.subr.mxu0 0.0
    %291 = vmatpush1.xpose.msra.mxu0 0.0
    %292 = vmatprep.subr.mxu0 0.0
    %293 = vmatpush1.xpose.msra.mxu0 0.0
    %294 = vmatprep.subr.mxu0 0.0
    %295 = vmatpush1.xpose.msra.mxu0 0.0
    %296 = vmatprep.subr.mxu0 0.0
    %297 = vmatpush1.xpose.msra.mxu0 0.0
    %298 = vmatprep.subr.mxu0 0.0
    %299 = vmatpush1.xpose.msra.mxu0 0.0
    %300 = vmatprep.subr.mxu0 0.0
    %301 = vmatpush1.xpose.msra.mxu0 0.0
    %302 = vmatprep.subr.mxu0 0.0
    %303 = vmatpush1.xpose.msra.mxu0 0.0
    %304 = vmatprep.subr.mxu0 0.0
    %305 = vmatpush1.xpose.msra.mxu0 0.0
    %306 = vmatprep.subr.mxu0 0.0
    %307 = vmatpush1.xpose.msra.mxu0 0.0
    %308 = vmatprep.subr.mxu0 0.0
    %309 = vmatpush1.xpose.msra.mxu0 0.0
    %310 = vmatprep.subr.mxu0 0.0
    %311 = vmatpush1.xpose.msra.mxu0 0.0
    %312 = vmatprep.subr.mxu0 0.0
    %313 = vmatpush1.xpose.msra.mxu0 0.0
    %314 = vmatprep.subr.mxu0 0.0
    %315 = vmatpush1.xpose.msra.mxu0 0.0
    %316 = vmatprep.subr.mxu0 0.0
    %317 = vmatpush1.xpose.msra.mxu0 0.0
    %318 = vmatprep.subr.mxu0 0.0
    %319 = vmatpush1.xpose.msra.mxu0 0.0
    %320 = vmatprep.subr.mxu0 0.0
    %321 = vmatpush1.xpose.msra.mxu0 0.0
    %322 = vmatprep.subr.mxu0 0.0
    %323 = vmatpush1.xpose.msra.mxu0 0.0
    %324 = vmatprep.subr.mxu0 0.0
    %325 = vmatpush1.xpose.msra.mxu0 0.0
    %326 = vmatprep.subr.mxu0 0.0
    %327 = vmatpush1.xpose.msra.mxu0 0.0
    %328 = vmatprep.subr.mxu0 0.0
    %329 = vmatpush1.xpose.msra.mxu0 0.0
    %330 = vmatprep.subr.mxu0 0.0
    %331 = vmatpush1.xpose.msra.mxu0 0.0
    %332 = vmatprep.subr.mxu0 0.0
    %333 = vmatpush1.xpose.msra.mxu0 0.0
    %334 = vmatprep.subr.mxu0 0.0
    %335 = vmatpush1.xpose.msra.mxu0 0.0
    %336 = vmatprep.subr.mxu0 0.0
    %337 = vmatpush1.xpose.msra.mxu0 0.0
    %338 = vmatprep.subr.mxu0 0.0
    %339 = vmatpush1.xpose.msra.mxu0 0.0
    %340 = vmatprep.subr.mxu0 0.0
    %341 = vmatpush1.xpose.msra.mxu0 0.0
    %342 = vmatprep.subr.mxu0 0.0
    %343 = vmatpush1.xpose.msra.mxu0 0.0
    %344 = vmatprep.subr.mxu0 0.0
    %345 = vmatpush1.xpose.msra.mxu0 0.0
    %346 = vmatprep.subr.mxu0 0.0
    %347 = vmatpush1.xpose.msra.mxu0 0.0
    %v348 = vand.u32 %v38, 4294901760
    %v349 = vsub.f32 %v38, %v348
    %v350 = vand.u32 %v349, 4294901760
    %351 = vmatprep.mubr.f32.mxu0 %v350
    %v352 = vand.u32 %v37, 4294901760
    %v353 = vsub.f32 %v37, %v352
    %v354 = vand.u32 %v353, 4294901760
    %355 = vmatmul.mubr.f32.gmra.mrb[0].mxu0 %v354
    %v356 = vpop.f32.mrb[0].mxu0
    %v357 = vadd.f32 %v279, %v356
    %v358 = vpop.f32.mrb[0].mxu0
    %359 = vdwg.mxu0
    %v360 = vand.u32 %v38, 4294901760
    %v361 = vsub.f32 %v38, %v360
    %v362 = vand.u32 %v361, 4294901760
    %363 = vmatprep.subr.mxu0 %v362
    %v364 = vand.u32 %v37, 4294901760
    %v365 = vsub.f32 %v37, %v364
    %v366 = vand.u32 %v365, 4294901760
    %367 = vmatpush1.xpose.msra.mxu0 %v366
    %368 = vmatprep.subr.mxu0 0.0
    %369 = vmatpush1.xpose.msra.mxu0 0.0
    %370 = vmatprep.subr.mxu0 0.0
    %371 = vmatpush1.xpose.msra.mxu0 0.0
    %372 = vmatprep.subr.mxu0 0.0
    %373 = vmatpush1.xpose.msra.mxu0 0.0
    %374 = vmatprep.subr.mxu0 0.0
    %375 = vmatpush1.xpose.msra.mxu0 0.0
    %376 = vmatprep.subr.mxu0 0.0
    %377 = vmatpush1.xpose.msra.mxu0 0.0
    %378 = vmatprep.subr.mxu0 0.0
    %379 = vmatpush1.xpose.msra.mxu0 0.0
    %380 = vmatprep.subr.mxu0 0.0
    %381 = vmatpush1.xpose.msra.mxu0 0.0
    %382 = vmatprep.subr.mxu0 0.0
    %383 = vmatpush1.xpose.msra.mxu0 0.0
    %384 = vmatprep.subr.mxu0 0.0
    %385 = vmatpush1.xpose.msra.mxu0 0.0
    %386 = vmatprep.subr.mxu0 0.0
    %387 = vmatpush1.xpose.msra.mxu0 0.0
    %388 = vmatprep.subr.mxu0 0.0
    %389 = vmatpush1.xpose.msra.mxu0 0.0
    %390 = vmatprep.subr.mxu0 0.0
    %391 = vmatpush1.xpose.msra.mxu0 0.0
    %392 = vmatprep.subr.mxu0 0.0
    %393 = vmatpush1.xpose.msra.mxu0 0.0
    %394 = vmatprep.subr.mxu0 0.0
    %395 = vmatpush1.xpose.msra.mxu0 0.0
    %396 = vmatprep.subr.mxu0 0.0
    %397 = vmatpush1.xpose.msra.mxu0 0.0
    %398 = vmatprep.subr.mxu0 0.0
    %399 = vmatpush1.xpose.msra.mxu0 0.0
    %400 = vmatprep.subr.mxu0 0.0
    %401 = vmatpush1.xpose.msra.mxu0 0.0
    %402 = vmatprep.subr.mxu0 0.0
    %403 = vmatpush1.xpose.msra.mxu0 0.0
    %404 = vmatprep.subr.mxu0 0.0
    %405 = vmatpush1.xpose.msra.mxu0 0.0
    %406 = vmatprep.subr.mxu0 0.0
    %407 = vmatpush1.xpose.msra.mxu0 0.0
    %408 = vmatprep.subr.mxu0 0.0
    %409 = vmatpush1.xpose.msra.mxu0 0.0
    %410 = vmatprep.subr.mxu0 0.0
    %411 = vmatpush1.xpose.msra.mxu0 0.0
    %412 = vmatprep.subr.mxu0 0.0
    %413 = vmatpush1.xpose.msra.mxu0 0.0
    %414 = vmatprep.subr.mxu0 0.0
    %415 = vmatpush1.xpose.msra.mxu0 0.0
    %416 = vmatprep.subr.mxu0 0.0
    %417 = vmatpush1.xpose.msra.mxu0 0.0
    %418 = vmatprep.subr.mxu0 0.0
    %419 = vmatpush1.xpose.msra.mxu0 0.0
    %420 = vmatprep.subr.mxu0 0.0
    %421 = vmatpush1.xpose.msra.mxu0 0.0
    %422 = vmatprep.subr.mxu0 0.0
    %423 = vmatpush1.xpose.msra.mxu0 0.0
    %424 = vmatprep.subr.mxu0 0.0
    %425 = vmatpush1.xpose.msra.mxu0 0.0
    %426 = vmatprep.subr.mxu0 0.0
    %427 = vmatpush1.xpose.msra.mxu0 0.0
    %428 = vmatprep.subr.mxu0 0.0
    %429 = vmatpush1.xpose.msra.mxu0 0.0
    %v430 = vand.u32 %v38, 4294901760
    %431 = vmatprep.mubr.f32.mxu0 %v430
    %v432 = vand.u32 %v37, 4294901760
    %433 = vmatmul.mubr.f32.gmra.mrb[0].mxu0 %v432
    %v434 = vpop.f32.mrb[0].mxu0
    %v435 = vadd.f32 %v357, %v434
    %v436 = vpop.f32.mrb[0].mxu0
    %437 = vdwg.mxu0
    %v438 = vand.u32 %v38, 4294901760
    %439 = vmatprep.subr.mxu0 %v438
    %v440 = vand.u32 %v37, 4294901760
    %441 = vmatpush1.xpose.msra.mxu0 %v440
    %442 = vmatprep.subr.mxu0 0.0
    %443 = vmatpush1.xpose.msra.mxu0 0.0
    %444 = vmatprep.subr.mxu0 0.0
    %445 = vmatpush1.xpose.msra.mxu0 0.0
    %446 = vmatprep.subr.mxu0 0.0
    %447 = vmatpush1.xpose.msra.mxu0 0.0
    %448 = vmatprep.subr.mxu0 0.0
    %449 = vmatpush1.xpose.msra.mxu0 0.0
    %450 = vmatprep.subr.mxu0 0.0
    %451 = vmatpush1.xpose.msra.mxu0 0.0
    %452 = vmatprep.subr.mxu0 0.0
    %453 = vmatpush1.xpose.msra.mxu0 0.0
    %454 = vmatprep.subr.mxu0 0.0
    %455 = vmatpush1.xpose.msra.mxu0 0.0
    %456 = vmatprep.subr.mxu0 0.0
    %457 = vmatpush1.xpose.msra.mxu0 0.0
    %458 = vmatprep.subr.mxu0 0.0
    %459 = vmatpush1.xpose.msra.mxu0 0.0
    %460 = vmatprep.subr.mxu0 0.0
    %461 = vmatpush1.xpose.msra.mxu0 0.0
    %462 = vmatprep.subr.mxu0 0.0
    %463 = vmatpush1.xpose.msra.mxu0 0.0
    %464 = vmatprep.subr.mxu0 0.0
    %465 = vmatpush1.xpose.msra.mxu0 0.0
    %466 = vmatprep.subr.mxu0 0.0
    %467 = vmatpush1.xpose.msra.mxu0 0.0
    %468 = vmatprep.subr.mxu0 0.0
    %469 = vmatpush1.xpose.msra.mxu0 0.0
    %470 = vmatprep.subr.mxu0 0.0
    %471 = vmatpush1.xpose.msra.mxu0 0.0
    %472 = vmatprep.subr.mxu0 0.0
    %473 = vmatpush1.xpose.msra.mxu0 0.0
    %474 = vmatprep.subr.mxu0 0.0
    %475 = vmatpush1.xpose.msra.mxu0 0.0
    %476 = vmatprep.subr.mxu0 0.0
    %477 = vmatpush1.xpose.msra.mxu0 0.0
    %478 = vmatprep.subr.mxu0 0.0
    %479 = vmatpush1.xpose.msra.mxu0 0.0
    %480 = vmatprep.subr.mxu0 0.0
    %481 = vmatpush1.xpose.msra.mxu0 0.0
    %482 = vmatprep.subr.mxu0 0.0
    %483 = vmatpush1.xpose.msra.mxu0 0.0
    %484 = vmatprep.subr.mxu0 0.0
    %485 = vmatpush1.xpose.msra.mxu0 0.0
    %486 = vmatprep.subr.mxu0 0.0
    %487 = vmatpush1.xpose.msra.mxu0 0.0
    %488 = vmatprep.subr.mxu0 0.0
    %489 = vmatpush1.xpose.msra.mxu0 0.0
    %490 = vmatprep.subr.mxu0 0.0
    %491 = vmatpush1.xpose.msra.mxu0 0.0
    %492 = vmatprep.subr.mxu0 0.0
    %493 = vmatpush1.xpose.msra.mxu0 0.0
    %494 = vmatprep.subr.mxu0 0.0
    %495 = vmatpush1.xpose.msra.mxu0 0.0
    %496 = vmatprep.subr.mxu0 0.0
    %497 = vmatpush1.xpose.msra.mxu0 0.0
    %498 = vmatprep.subr.mxu0 0.0
    %499 = vmatpush1.xpose.msra.mxu0 0.0
    %500 = vmatprep.subr.mxu0 0.0
    %501 = vmatpush1.xpose.msra.mxu0 0.0
    %502 = vmatprep.subr.mxu0 0.0
    %503 = vmatpush1.xpose.msra.mxu0 0.0
    %v504 = vand.u32 %v38, 4294901760
    %505 = vmatprep.mubr.f32.mxu0 %v504
    %v506 = vand.u32 %v37, 4294901760
    %507 = vmatmul.mubr.f32.gmra.mrb[0].mxu0 %v506
    %v508 = vpop.f32.mrb[0].mxu0
    %v509 = vadd.f32 %v435, %v508
    %v510 = vpop.f32.mrb[0].mxu0
    %511 = vdwg.mxu0
    %v512 = vadd.f32 %v39, %v509
    %vm513 = vcmask 64512
    %514 = vst.msk [vmem:[#allocation5] sm:$0xff] %vm513, %v512
    %v515 = vld [vmem:[%s2] sm:$0xff]
    %v516 = vadd.f32 %v37, %v38
    %517 = vadd.xlane.f32.xlu0 %v516
    %v518 = vpop.xlane.xlu0 %517
    %v519 = vadd.f32 %v515, %v518
    %vm520 = vcmask 7168
    %521 = vst.msk [vmem:[%s2] sm:$0xff] %vm520, %v519
    // Predicated region
    $region14: #{tpu_custom_call.1} parent=1 // pred_check
      _
    $region15: #{tpu_custom_call.1} parent=1 // pred_check_branch
      %523 = sbr.rel (0) target = $region17
    $region16: #{tpu_custom_call.1} parent=1 // pred_region
      %s525 = ssub.s32 128, 128
      %526 = vsyncadd [#allocation4], %s525
      %s528 = sshll.u32 [#allocation5], 4
      %s529 = int_to_ptr.vmem [resolvable:$true] %s528
      %531 = dma.vmem_to_hbm [thread:$0]  %s529, 128, %s1, [#allocation4]
    $region17: #{tpu_custom_call.1} parent=1 // pred_fallthru
      _
    // Predicated region
    $region18: #{tpu_custom_call.1} parent=1 // pred_check
      _
    $region19: #{tpu_custom_call.1} parent=1 // pred_check_branch
      %533 = sbr.rel (0) target = $region21
    $region20: #{tpu_custom_call.1} parent=1 // pred_region
      _
    $region21: #{tpu_custom_call.1} parent=1 // pred_fallthru
      _
    // Predicated region
    $region22: #{tpu_custom_call.1} parent=1 // pred_check
      _
    $region23: #{tpu_custom_call.1} parent=1 // pred_check_branch
      %535 = sbr.rel (0) target = $region25
    $region24: #{tpu_custom_call.1} parent=1 // pred_region
      %536 = dma.done [#allocation4], 128
    $region25: #{tpu_custom_call.1} parent=1 // pred_fallthru
      _
    // Predicated region
    $region26: #{tpu_custom_call.1} parent=1 // pred_check
      _
    $region27: #{tpu_custom_call.1} parent=1 // pred_check_branch
      %538 = sbr.rel (0) target = $region29
    $region28: #{tpu_custom_call.1} parent=1 // pred_region
      _
    $region29: #{tpu_custom_call.1} parent=1 // pred_fallthru
      _
    %539 = vsyncpa [#allocation3], 1
    %540 = vsyncpa [#allocation4], 1

</llo_original>
